<compile_context>
chip_gen: v5e
topology: v5e:2x2
jax: 0.10.0
libtpu: 0.0.40
codegen_flags: <defaults>
</compile_context>

<pallas_src>
import functools

import jax
import jax.numpy as jnp
from jax.experimental import pallas as pl
from jax.experimental.pallas import tpu as pltpu

IN_PLANES = 32                            # ResBlock.out_planes
BN_PLANES = 3
V_FC_SIZE = P_FC_SIZE = IN_PLANES // 2    # 16
BOARD_WIDTH = 8
HW = BOARD_WIDTH * BOARD_WIDTH            # 64
NUM_UNIQUE_ACTIONS = 64
BN_EPS = 1e-5
STACK_ROWS = 32                           # 3 value + 16 policy rows, zero-padded


# -----------------------------------------------------------------------------
# Fused kernel: stacked 1x1-conv (+folded BN) + ReLU, channel-major flatten,
# value FC head (fc1 -> relu -> fc2 -> tanh) and policy FC head (fc -> softmax).
# No grid: the whole (tiny) batch is handled in one invocation.
# -----------------------------------------------------------------------------
def _outblock_kernel(batch,
                     x_ref, wc_ref, bc_ref,
                     w1_ref, b1_ref, w2_ref, b2_ref,
                     wp_ref, bp_ref,
                     p_out_ref, v_out_ref,
                     z_ref, vflat_ref, pflat_ref):
    # ---- Stage 1: stacked 1x1 conv (+ folded BN + bias) + ReLU --------------
    # (STACK_ROWS, 32) @ (32, B*HW) -> (STACK_ROWS, B*HW); one MXU push covers
    # both heads and all samples; lane dim = B*HW (=128 at B=2).
    z = jnp.dot(wc_ref[...], x_ref[...], preferred_element_type=jnp.float32)
    z_ref[...] = jnp.maximum(z + bc_ref[...], 0.0)

    # ---- Stage 2: channel-major flatten (PyTorch .view on NCHW) -------------
    # vflat[b, c*HW + h] = z[c, b*HW + h]; lane-aligned (1, HW) row copies into
    # VMEM scratch -- no tile-crossing reshape, no HBM round-trip.
    for b in range(batch):
        src = slice(b * HW, (b + 1) * HW)
        for c in range(BN_PLANES):
            vflat_ref[b:b + 1, c * HW:(c + 1) * HW] = z_ref[c:c + 1, src]
        for c in range(P_FC_SIZE):
            row = BN_PLANES + c
            pflat_ref[b:b + 1, c * HW:(c + 1) * HW] = z_ref[row:row + 1, src]

    # ---- Stage 3: value head: fc1 -> ReLU -> fc2 -> tanh --------------------
    h = jnp.dot(vflat_ref[...], w1_ref[...],
                preferred_element_type=jnp.float32) + b1_ref[...]
    h = jnp.maximum(h, 0.0)
    v = jnp.dot(h, w2_ref[...], preferred_element_type=jnp.float32) + b2_ref[...]
    v_out_ref[...] = jnp.tanh(v)

    # ---- Stage 4: policy head: fc -> softmax(dim=1) -------------------------
    logits = jnp.dot(pflat_ref[...], wp_ref[...],
                     preferred_element_type=jnp.float32) + bp_ref[...]
    m = jnp.max(logits, axis=1, keepdims=True)
    e = jnp.exp(logits - m)
    s = jnp.sum(e, axis=1, keepdims=True)
    r = pl.reciprocal(s, approx=True)          # EUP slot
    r = r * (2.0 - s * r)                      # one Newton step -> ~f32 accuracy
    p_out_ref[...] = e * r


# -----------------------------------------------------------------------------
# Parameter construction (PyTorch layouts) and one-time host-side preparation.
# -----------------------------------------------------------------------------
def init_params(key):
    ks = jax.random.split(key, 10)
    scl = 0.05
    p = {}
    # v head conv + bn
    p["v_conv_w"] = scl * jax.random.normal(ks[0], (BN_PLANES, IN_PLANES), jnp.float32)
    p["v_conv_b"] = scl * jax.random.normal(ks[1], (BN_PLANES,), jnp.float32)
    p["v_bn_gamma"] = 1.0 + 0.1 * jnp.arange(BN_PLANES, dtype=jnp.float32)
    p["v_bn_beta"] = 0.01 * jnp.arange(BN_PLANES, dtype=jnp.float32)
    p["v_bn_mean"] = 0.02 * jnp.arange(BN_PLANES, dtype=jnp.float32)
    p["v_bn_var"] = 1.0 + 0.05 * jnp.arange(BN_PLANES, dtype=jnp.float32)
    # p head conv + bn
    p["p_conv_w"] = scl * jax.random.normal(ks[2], (P_FC_SIZE, IN_PLANES), jnp.float32)
    p["p_conv_b"] = scl * jax.random.normal(ks[3], (P_FC_SIZE,), jnp.float32)
    p["p_bn_gamma"] = 1.0 + 0.05 * jnp.arange(P_FC_SIZE, dtype=jnp.float32)
    p["p_bn_beta"] = 0.01 * jnp.arange(P_FC_SIZE, dtype=jnp.float32)
    p["p_bn_mean"] = 0.01 * jnp.arange(P_FC_SIZE, dtype=jnp.float32)
    p["p_bn_var"] = 1.0 + 0.02 * jnp.arange(P_FC_SIZE, dtype=jnp.float32)
    # fc layers (PyTorch Linear weight layout: (out, in))
    p["v_fc1_w"] = scl * jax.random.normal(ks[4], (V_FC_SIZE, BN_PLANES * HW), jnp.float32)
    p["v_fc1_b"] = scl * jax.random.normal(ks[5], (V_FC_SIZE,), jnp.float32)
    p["v_fc2_w"] = scl * jax.random.normal(ks[6], (1, V_FC_SIZE), jnp.float32)
    p["v_fc2_b"] = scl * jax.random.normal(ks[7], (1,), jnp.float32)
    p["p_fc_w"] = scl * jax.random.normal(ks[8], (NUM_UNIQUE_ACTIONS, P_FC_SIZE * HW), jnp.float32)
    p["p_fc_b"] = scl * jax.random.normal(ks[9], (NUM_UNIQUE_ACTIONS,), jnp.float32)
    return p


def prepare_params(params):
    """One-time host prep: fold eval-mode BN + conv bias into a stacked conv
    weight, and pre-transpose FC weights -- nothing of this runs per call."""
    # TODO(synk): BatchNorm is folded in eval mode (running stats); training-mode
    # batch statistics are not computed in-kernel.
    sv = params["v_bn_gamma"] / jnp.sqrt(params["v_bn_var"] + BN_EPS)
    tv = params["v_bn_beta"] - params["v_bn_mean"] * sv
    sp = params["p_bn_gamma"] / jnp.sqrt(params["p_bn_var"] + BN_EPS)
    tp = params["p_bn_beta"] - params["p_bn_mean"] * sp

    # y = s*(Wx + b) + t  ==  (s*W) x + (s*b + t)
    wv = params["v_conv_w"] * sv[:, None]              # (3, 32)
    bv = params["v_conv_b"] * sv + tv                  # (3,)
    wp = params["p_conv_w"] * sp[:, None]              # (16, 32)
    bp = params["p_conv_b"] * sp + tp                  # (16,)

    n_stacked = BN_PLANES + P_FC_SIZE                  # 19
    wc = jnp.zeros((STACK_ROWS, IN_PLANES), jnp.float32)
    wc = wc.at[:n_stacked].set(jnp.concatenate([wv, wp], axis=0))
    bc = jnp.zeros((STACK_ROWS, 1), jnp.float32)
    bc = bc.at[:n_stacked, 0].set(jnp.concatenate([bv, bp], axis=0))

    return {
        "wc": wc, "bc": bc,
        "w1t": params["v_fc1_w"].T,                    # (192, 16)
        "b1": params["v_fc1_b"].reshape(1, -1),        # (1, 16)
        "w2t": params["v_fc2_w"].T,                    # (16, 1)
        "b2": params["v_fc2_b"].reshape(1, -1),        # (1, 1)
        "wpt": params["p_fc_w"].T,                     # (1024, 64)
        "bpf": params["p_fc_b"].reshape(1, -1),        # (1, 64)
    }


# -----------------------------------------------------------------------------
# Forward pass: one fused pallas_call, no grid.
# -----------------------------------------------------------------------------
def out_block_forward(x_nchw, prep):
    B = x_nchw.shape[0]
    # Lane-pack the batch: (B, C, H, W) -> (C, B*HW); tiny relayout that makes
    # every kernel tile 128-lane dense at B=2.
    x = x_nchw.astype(jnp.float32).reshape(B, IN_PLANES, HW)
    x_packed = x.transpose(1, 0, 2).reshape(IN_PLANES, B * HW)

    p_out, v_out = pl.pallas_call(
        functools.partial(_outblock_kernel, B),
        out_shape=(
            jax.ShapeDtypeStruct((B, NUM_UNIQUE_ACTIONS), jnp.float32),
            jax.ShapeDtypeStruct((B, 1), jnp.float32),
        ),
        scratch_shapes=[
            pltpu.VMEM((STACK_ROWS, B * HW), jnp.float32),   # conv activations
            pltpu.VMEM((B, BN_PLANES * HW), jnp.float32),    # value flatten
            pltpu.VMEM((B, P_FC_SIZE * HW), jnp.float32),    # policy flatten
        ],
    )(x_packed, prep["wc"], prep["bc"],
      prep["w1t"], prep["b1"], prep["w2t"], prep["b2"],
      prep["wpt"], prep["bpf"])
    return p_out, v_out


# -----------------------------------------------------------------------------
# Pure-JAX reference (eval-mode BN), for a semantics check.
# -----------------------------------------------------------------------------
def out_block_reference(x_nchw, params):
    B = x_nchw.shape[0]
    x = x_nchw.astype(jnp.float32).reshape(B, IN_PLANES, HW)
    sv = params["v_bn_gamma"] / jnp.sqrt(params["v_bn_var"] + BN_EPS)
    tv = params["v_bn_beta"] - params["v_bn_mean"] * sv
    sp = params["p_bn_gamma"] / jnp.sqrt(params["p_bn_var"] + BN_EPS)
    tp = params["p_bn_beta"] - params["p_bn_mean"] * sp

    v = jnp.einsum("oc,bch->boh", params["v_conv_w"], x) \
        + params["v_conv_b"][None, :, None]
    v = jnp.maximum(v * sv[None, :, None] + tv[None, :, None], 0.0)
    v = v.reshape(B, BN_PLANES * HW)
    v = jnp.maximum(v @ params["v_fc1_w"].T + params["v_fc1_b"], 0.0)
    v = jnp.tanh(v @ params["v_fc2_w"].T + params["v_fc2_b"])

    p = jnp.einsum("oc,bch->boh", params["p_conv_w"], x) \
        + params["p_conv_b"][None, :, None]
    p = jnp.maximum(p * sp[None, :, None] + tp[None, :, None], 0.0)
    p = p.reshape(B, P_FC_SIZE * HW)
    logits = p @ params["p_fc_w"].T + params["p_fc_b"]
    return jax.nn.softmax(logits, axis=1), v


if __name__ == "__main__":
    key = jax.random.PRNGKey(0)
    kx, kp = jax.random.split(key)
    params = init_params(kp)
    prep = prepare_params(params)   # one-time host prep, outside the jitted call

    # input: output of the residual tower, NCHW = (batch, 32, 8, 8)
    x = jax.random.normal(kx, (2, IN_PLANES, BOARD_WIDTH, BOARD_WIDTH),
                          jnp.float32)

    fwd = jax.jit(out_block_forward)
    p_probs, v_val = fwd(x, prep)
    jax.block_until_ready((p_probs, v_val))

    p_ref, v_ref = out_block_reference(x, params)

    assert p_probs.shape == (2, NUM_UNIQUE_ACTIONS)
    assert v_val.shape == (2, 1)
    assert bool(jnp.all(jnp.isfinite(p_probs))) and bool(jnp.all(jnp.isfinite(v_val)))
    assert bool(jnp.allclose(jnp.sum(p_probs, axis=1), 1.0, atol=1e-4))
    assert bool(jnp.all(jnp.abs(v_val) <= 1.0))
    assert bool(jnp.allclose(p_probs, p_ref, atol=5e-3))
    assert bool(jnp.allclose(v_val, v_ref, atol=5e-3))
    print("KERNEL_OK")
</pallas_src>

<mosaic_0001>
module attributes {stable_mosaic.version = 11 : i64} {
  func.func @_outblock_kernel(%arg0: memref<32x128xf32, #tpu.memory_space<vmem>>, %arg1: memref<32x32xf32, #tpu.memory_space<vmem>>, %arg2: memref<32x1xf32, #tpu.memory_space<vmem>>, %arg3: memref<192x16xf32, #tpu.memory_space<vmem>>, %arg4: memref<1x16xf32, #tpu.memory_space<vmem>>, %arg5: memref<16x1xf32, #tpu.memory_space<vmem>>, %arg6: memref<1x1xf32, #tpu.memory_space<vmem>>, %arg7: memref<1024x64xf32, #tpu.memory_space<vmem>>, %arg8: memref<1x64xf32, #tpu.memory_space<vmem>>, %arg9: memref<2x64xf32, #tpu.memory_space<vmem>>, %arg10: memref<2x1xf32, #tpu.memory_space<vmem>>, %arg11: memref<32x128xf32, #tpu.memory_space<vmem>>, %arg12: memref<2x192xf32, #tpu.memory_space<vmem>>, %arg13: memref<2x1024xf32, #tpu.memory_space<vmem>>) attributes {dimension_semantics = [], scalar_prefetch = 0 : i64, scratch_operands = 3 : i64, tpu.core_type = #tpu.core_type<tc>} {
    %c0 = arith.constant 0 : index
    %c0_0 = arith.constant 0 : index
    %0 = vector.load %arg1[%c0, %c0_0] : memref<32x32xf32, #tpu.memory_space<vmem>>, vector<32x32xf32>
    %c0_1 = arith.constant 0 : index
    %c0_2 = arith.constant 0 : index
    %1 = vector.load %arg0[%c0_1, %c0_2] : memref<32x128xf32, #tpu.memory_space<vmem>>, vector<32x128xf32>
    %cst = arith.constant dense<0.000000e+00> : vector<32x128xf32>
    %2 = tpu.matmul %0, %1, %cst {dimension_numbers = #tpu.dot_dimension_numbers<[1], [0], [0], [1], [0, 0, 1, 1], [], []>} : vector<32x32xf32>, vector<32x128xf32>, vector<32x128xf32> -> vector<32x128xf32>
    %c0_3 = arith.constant 0 : index
    %c0_4 = arith.constant 0 : index
    %3 = vector.load %arg2[%c0_3, %c0_4] : memref<32x1xf32, #tpu.memory_space<vmem>>, vector<32x1xf32>
    %4 = vector.broadcast %3 : vector<32x1xf32> to vector<32x128xf32>
    %5 = arith.addf %2, %4 : vector<32x128xf32>
    %cst_5 = arith.constant 0.000000e+00 : f32
    %6 = vector.broadcast %cst_5 : f32 to vector<32x128xf32>
    %7 = arith.maximumf %5, %6 : vector<32x128xf32>
    %c0_6 = arith.constant 0 : index
    %c0_7 = arith.constant 0 : index
    %8 = vector.load %arg11[%c0_6, %c0_7] : memref<32x128xf32, #tpu.memory_space<vmem>>, vector<32x128xf32>
    tpu.vector_store %arg11[%c0_6, %c0_7], %7 {strides = array<i32>} : memref<32x128xf32, #tpu.memory_space<vmem>>, vector<32x128xf32>,
    %c0_8 = arith.constant 0 : index
    %c0_9 = arith.constant 0 : index
    %9 = vector.load %arg11[%c0_8, %c0_9] : memref<32x128xf32, #tpu.memory_space<vmem>>, vector<1x64xf32>
    %c0_10 = arith.constant 0 : index
    %c0_11 = arith.constant 0 : index
    %10 = vector.load %arg12[%c0_10, %c0_11] : memref<2x192xf32, #tpu.memory_space<vmem>>, vector<1x64xf32>
    tpu.vector_store %arg12[%c0_10, %c0_11], %9 {strides = array<i32>} : memref<2x192xf32, #tpu.memory_space<vmem>>, vector<1x64xf32>,
    %c1 = arith.constant 1 : index
    %c0_12 = arith.constant 0 : index
    %11 = vector.load %arg11[%c1, %c0_12] : memref<32x128xf32, #tpu.memory_space<vmem>>, vector<1x64xf32>
    %c0_13 = arith.constant 0 : index
    %c64 = arith.constant 64 : index
    %12 = vector.load %arg12[%c0_13, %c64] : memref<2x192xf32, #tpu.memory_space<vmem>>, vector<1x64xf32>
    tpu.vector_store %arg12[%c0_13, %c64], %11 {strides = array<i32>} : memref<2x192xf32, #tpu.memory_space<vmem>>, vector<1x64xf32>,
    %c2 = arith.constant 2 : index
    %c0_14 = arith.constant 0 : index
    %13 = vector.load %arg11[%c2, %c0_14] : memref<32x128xf32, #tpu.memory_space<vmem>>, vector<1x64xf32>
    %c0_15 = arith.constant 0 : index
    %c128 = arith.constant 128 : index
    %14 = vector.load %arg12[%c0_15, %c128] : memref<2x192xf32, #tpu.memory_space<vmem>>, vector<1x64xf32>
    tpu.vector_store %arg12[%c0_15, %c128], %13 {strides = array<i32>} : memref<2x192xf32, #tpu.memory_space<vmem>>, vector<1x64xf32>,
    %c3 = arith.constant 3 : index
    %c0_16 = arith.constant 0 : index
    %15 = vector.load %arg11[%c3, %c0_16] : memref<32x128xf32, #tpu.memory_space<vmem>>, vector<1x64xf32>
    %c0_17 = arith.constant 0 : index
    %c0_18 = arith.constant 0 : index
    %16 = vector.load %arg13[%c0_17, %c0_18] : memref<2x1024xf32, #tpu.memory_space<vmem>>, vector<1x64xf32>
    tpu.vector_store %arg13[%c0_17, %c0_18], %15 {strides = array<i32>} : memref<2x1024xf32, #tpu.memory_space<vmem>>, vector<1x64xf32>,
    %c4 = arith.constant 4 : index
    %c0_19 = arith.constant 0 : index
    %17 = vector.load %arg11[%c4, %c0_19] : memref<32x128xf32, #tpu.memory_space<vmem>>, vector<1x64xf32>
    %c0_20 = arith.constant 0 : index
    %c64_21 = arith.constant 64 : index
    %18 = vector.load %arg13[%c0_20, %c64_21] : memref<2x1024xf32, #tpu.memory_space<vmem>>, vector<1x64xf32>
    tpu.vector_store %arg13[%c0_20, %c64_21], %17 {strides = array<i32>} : memref<2x1024xf32, #tpu.memory_space<vmem>>, vector<1x64xf32>,
    %c5 = arith.constant 5 : index
    %c0_22 = arith.constant 0 : index
    %19 = vector.load %arg11[%c5, %c0_22] : memref<32x128xf32, #tpu.memory_space<vmem>>, vector<1x64xf32>
    %c0_23 = arith.constant 0 : index
    %c128_24 = arith.constant 128 : index
    %20 = vector.load %arg13[%c0_23, %c128_24] : memref<2x1024xf32, #tpu.memory_space<vmem>>, vector<1x64xf32>
    tpu.vector_store %arg13[%c0_23, %c128_24], %19 {strides = array<i32>} : memref<2x1024xf32, #tpu.memory_space<vmem>>, vector<1x64xf32>,
    %c6 = arith.constant 6 : index
    %c0_25 = arith.constant 0 : index
    %21 = vector.load %arg11[%c6, %c0_25] : memref<32x128xf32, #tpu.memory_space<vmem>>, vector<1x64xf32>
    %c0_26 = arith.constant 0 : index
    %c192 = arith.constant 192 : index
    %22 = vector.load %arg13[%c0_26, %c192] : memref<2x1024xf32, #tpu.memory_space<vmem>>, vector<1x64xf32>
    tpu.vector_store %arg13[%c0_26, %c192], %21 {strides = array<i32>} : memref<2x1024xf32, #tpu.memory_space<vmem>>, vector<1x64xf32>,
    %c7 = arith.constant 7 : index
    %c0_27 = arith.constant 0 : index
    %23 = vector.load %arg11[%c7, %c0_27] : memref<32x128xf32, #tpu.memory_space<vmem>>, vector<1x64xf32>
    %c0_28 = arith.constant 0 : index
    %c256 = arith.constant 256 : index
    %24 = vector.load %arg13[%c0_28, %c256] : memref<2x1024xf32, #tpu.memory_space<vmem>>, vector<1x64xf32>
    tpu.vector_store %arg13[%c0_28, %c256], %23 {strides = array<i32>} : memref<2x1024xf32, #tpu.memory_space<vmem>>, vector<1x64xf32>,
    %c8 = arith.constant 8 : index
    %c0_29 = arith.constant 0 : index
    %25 = vector.load %arg11[%c8, %c0_29] : memref<32x128xf32, #tpu.memory_space<vmem>>, vector<1x64xf32>
    %c0_30 = arith.constant 0 : index
    %c320 = arith.constant 320 : index
    %26 = vector.load %arg13[%c0_30, %c320] : memref<2x1024xf32, #tpu.memory_space<vmem>>, vector<1x64xf32>
    tpu.vector_store %arg13[%c0_30, %c320], %25 {strides = array<i32>} : memref<2x1024xf32, #tpu.memory_space<vmem>>, vector<1x64xf32>,
    %c9 = arith.constant 9 : index
    %c0_31 = arith.constant 0 : index
    %27 = vector.load %arg11[%c9, %c0_31] : memref<32x128xf32, #tpu.memory_space<vmem>>, vector<1x64xf32>
    %c0_32 = arith.constant 0 : index
    %c384 = arith.constant 384 : index
    %28 = vector.load %arg13[%c0_32, %c384] : memref<2x1024xf32, #tpu.memory_space<vmem>>, vector<1x64xf32>
    tpu.vector_store %arg13[%c0_32, %c384], %27 {strides = array<i32>} : memref<2x1024xf32, #tpu.memory_space<vmem>>, vector<1x64xf32>,
    %c10 = arith.constant 10 : index
    %c0_33 = arith.constant 0 : index
    %29 = vector.load %arg11[%c10, %c0_33] : memref<32x128xf32, #tpu.memory_space<vmem>>, vector<1x64xf32>
    %c0_34 = arith.constant 0 : index
    %c448 = arith.constant 448 : index
    %30 = vector.load %arg13[%c0_34, %c448] : memref<2x1024xf32, #tpu.memory_space<vmem>>, vector<1x64xf32>
    tpu.vector_store %arg13[%c0_34, %c448], %29 {strides = array<i32>} : memref<2x1024xf32, #tpu.memory_space<vmem>>, vector<1x64xf32>,
    %c11 = arith.constant 11 : index
    %c0_35 = arith.constant 0 : index
    %31 = vector.load %arg11[%c11, %c0_35] : memref<32x128xf32, #tpu.memory_space<vmem>>, vector<1x64xf32>
    %c0_36 = arith.constant 0 : index
    %c512 = arith.constant 512 : index
    %32 = vector.load %arg13[%c0_36, %c512] : memref<2x1024xf32, #tpu.memory_space<vmem>>, vector<1x64xf32>
    tpu.vector_store %arg13[%c0_36, %c512], %31 {strides = array<i32>} : memref<2x1024xf32, #tpu.memory_space<vmem>>, vector<1x64xf32>,
    %c12 = arith.constant 12 : index
    %c0_37 = arith.constant 0 : index
    %33 = vector.load %arg11[%c12, %c0_37] : memref<32x128xf32, #tpu.memory_space<vmem>>, vector<1x64xf32>
    %c0_38 = arith.constant 0 : index
    %c576 = arith.constant 576 : index
    %34 = vector.load %arg13[%c0_38, %c576] : memref<2x1024xf32, #tpu.memory_space<vmem>>, vector<1x64xf32>
    tpu.vector_store %arg13[%c0_38, %c576], %33 {strides = array<i32>} : memref<2x1024xf32, #tpu.memory_space<vmem>>, vector<1x64xf32>,
    %c13 = arith.constant 13 : index
    %c0_39 = arith.constant 0 : index
    %35 = vector.load %arg11[%c13, %c0_39] : memref<32x128xf32, #tpu.memory_space<vmem>>, vector<1x64xf32>
    %c0_40 = arith.constant 0 : index
    %c640 = arith.constant 640 : index
    %36 = vector.load %arg13[%c0_40, %c640] : memref<2x1024xf32, #tpu.memory_space<vmem>>, vector<1x64xf32>
    tpu.vector_store %arg13[%c0_40, %c640], %35 {strides = array<i32>} : memref<2x1024xf32, #tpu.memory_space<vmem>>, vector<1x64xf32>,
    %c14 = arith.constant 14 : index
    %c0_41 = arith.constant 0 : index
    %37 = vector.load %arg11[%c14, %c0_41] : memref<32x128xf32, #tpu.memory_space<vmem>>, vector<1x64xf32>
    %c0_42 = arith.constant 0 : index
    %c704 = arith.constant 704 : index
    %38 = vector.load %arg13[%c0_42, %c704] : memref<2x1024xf32, #tpu.memory_space<vmem>>, vector<1x64xf32>
    tpu.vector_store %arg13[%c0_42, %c704], %37 {strides = array<i32>} : memref<2x1024xf32, #tpu.memory_space<vmem>>, vector<1x64xf32>,
    %c15 = arith.constant 15 : index
    %c0_43 = arith.constant 0 : index
    %39 = vector.load %arg11[%c15, %c0_43] : memref<32x128xf32, #tpu.memory_space<vmem>>, vector<1x64xf32>
    %c0_44 = arith.constant 0 : index
    %c768 = arith.constant 768 : index
    %40 = vector.load %arg13[%c0_44, %c768] : memref<2x1024xf32, #tpu.memory_space<vmem>>, vector<1x64xf32>
    tpu.vector_store %arg13[%c0_44, %c768], %39 {strides = array<i32>} : memref<2x1024xf32, #tpu.memory_space<vmem>>, vector<1x64xf32>,
    %c16 = arith.constant 16 : index
    %c0_45 = arith.constant 0 : index
    %41 = vector.load %arg11[%c16, %c0_45] : memref<32x128xf32, #tpu.memory_space<vmem>>, vector<1x64xf32>
    %c0_46 = arith.constant 0 : index
    %c832 = arith.constant 832 : index
    %42 = vector.load %arg13[%c0_46, %c832] : memref<2x1024xf32, #tpu.memory_space<vmem>>, vector<1x64xf32>
    tpu.vector_store %arg13[%c0_46, %c832], %41 {strides = array<i32>} : memref<2x1024xf32, #tpu.memory_space<vmem>>, vector<1x64xf32>,
    %c17 = arith.constant 17 : index
    %c0_47 = arith.constant 0 : index
    %43 = vector.load %arg11[%c17, %c0_47] : memref<32x128xf32, #tpu.memory_space<vmem>>, vector<1x64xf32>
    %c0_48 = arith.constant 0 : index
    %c896 = arith.constant 896 : index
    %44 = vector.load %arg13[%c0_48, %c896] : memref<2x1024xf32, #tpu.memory_space<vmem>>, vector<1x64xf32>
    tpu.vector_store %arg13[%c0_48, %c896], %43 {strides = array<i32>} : memref<2x1024xf32, #tpu.memory_space<vmem>>, vector<1x64xf32>,
    %c18 = arith.constant 18 : index
    %c0_49 = arith.constant 0 : index
    %45 = vector.load %arg11[%c18, %c0_49] : memref<32x128xf32, #tpu.memory_space<vmem>>, vector<1x64xf32>
    %c0_50 = arith.constant 0 : index
    %c960 = arith.constant 960 : index
    %46 = vector.load %arg13[%c0_50, %c960] : memref<2x1024xf32, #tpu.memory_space<vmem>>, vector<1x64xf32>
    tpu.vector_store %arg13[%c0_50, %c960], %45 {strides = array<i32>} : memref<2x1024xf32, #tpu.memory_space<vmem>>, vector<1x64xf32>,
    %c0_51 = arith.constant 0 : index
    %c64_52 = arith.constant 64 : index
    %47 = vector.load %arg11[%c0_51, %c64_52] : memref<32x128xf32, #tpu.memory_space<vmem>>, vector<1x64xf32>
    %c1_53 = arith.constant 1 : index
    %c0_54 = arith.constant 0 : index
    %48 = vector.load %arg12[%c1_53, %c0_54] : memref<2x192xf32, #tpu.memory_space<vmem>>, vector<1x64xf32>
    tpu.vector_store %arg12[%c1_53, %c0_54], %47 {strides = array<i32>} : memref<2x192xf32, #tpu.memory_space<vmem>>, vector<1x64xf32>,
    %c1_55 = arith.constant 1 : index
    %c64_56 = arith.constant 64 : index
    %49 = vector.load %arg11[%c1_55, %c64_56] : memref<32x128xf32, #tpu.memory_space<vmem>>, vector<1x64xf32>
    %c1_57 = arith.constant 1 : index
    %c64_58 = arith.constant 64 : index
    %50 = vector.load %arg12[%c1_57, %c64_58] : memref<2x192xf32, #tpu.memory_space<vmem>>, vector<1x64xf32>
    tpu.vector_store %arg12[%c1_57, %c64_58], %49 {strides = array<i32>} : memref<2x192xf32, #tpu.memory_space<vmem>>, vector<1x64xf32>,
    %c2_59 = arith.constant 2 : index
    %c64_60 = arith.constant 64 : index
    %51 = vector.load %arg11[%c2_59, %c64_60] : memref<32x128xf32, #tpu.memory_space<vmem>>, vector<1x64xf32>
    %c1_61 = arith.constant 1 : index
    %c128_62 = arith.constant 128 : index
    %52 = vector.load %arg12[%c1_61, %c128_62] : memref<2x192xf32, #tpu.memory_space<vmem>>, vector<1x64xf32>
    tpu.vector_store %arg12[%c1_61, %c128_62], %51 {strides = array<i32>} : memref<2x192xf32, #tpu.memory_space<vmem>>, vector<1x64xf32>,
    %c3_63 = arith.constant 3 : index
    %c64_64 = arith.constant 64 : index
    %53 = vector.load %arg11[%c3_63, %c64_64] : memref<32x128xf32, #tpu.memory_space<vmem>>, vector<1x64xf32>
    %c1_65 = arith.constant 1 : index
    %c0_66 = arith.constant 0 : index
    %54 = vector.load %arg13[%c1_65, %c0_66] : memref<2x1024xf32, #tpu.memory_space<vmem>>, vector<1x64xf32>
    tpu.vector_store %arg13[%c1_65, %c0_66], %53 {strides = array<i32>} : memref<2x1024xf32, #tpu.memory_space<vmem>>, vector<1x64xf32>,
    %c4_67 = arith.constant 4 : index
    %c64_68 = arith.constant 64 : index
    %55 = vector.load %arg11[%c4_67, %c64_68] : memref<32x128xf32, #tpu.memory_space<vmem>>, vector<1x64xf32>
    %c1_69 = arith.constant 1 : index
    %c64_70 = arith.constant 64 : index
    %56 = vector.load %arg13[%c1_69, %c64_70] : memref<2x1024xf32, #tpu.memory_space<vmem>>, vector<1x64xf32>
    tpu.vector_store %arg13[%c1_69, %c64_70], %55 {strides = array<i32>} : memref<2x1024xf32, #tpu.memory_space<vmem>>, vector<1x64xf32>,
    %c5_71 = arith.constant 5 : index
    %c64_72 = arith.constant 64 : index
    %57 = vector.load %arg11[%c5_71, %c64_72] : memref<32x128xf32, #tpu.memory_space<vmem>>, vector<1x64xf32>
    %c1_73 = arith.constant 1 : index
    %c128_74 = arith.constant 128 : index
    %58 = vector.load %arg13[%c1_73, %c128_74] : memref<2x1024xf32, #tpu.memory_space<vmem>>, vector<1x64xf32>
    tpu.vector_store %arg13[%c1_73, %c128_74], %57 {strides = array<i32>} : memref<2x1024xf32, #tpu.memory_space<vmem>>, vector<1x64xf32>,
    %c6_75 = arith.constant 6 : index
    %c64_76 = arith.constant 64 : index
    %59 = vector.load %arg11[%c6_75, %c64_76] : memref<32x128xf32, #tpu.memory_space<vmem>>, vector<1x64xf32>
    %c1_77 = arith.constant 1 : index
    %c192_78 = arith.constant 192 : index
    %60 = vector.load %arg13[%c1_77, %c192_78] : memref<2x1024xf32, #tpu.memory_space<vmem>>, vector<1x64xf32>
    tpu.vector_store %arg13[%c1_77, %c192_78], %59 {strides = array<i32>} : memref<2x1024xf32, #tpu.memory_space<vmem>>, vector<1x64xf32>,
    %c7_79 = arith.constant 7 : index
    %c64_80 = arith.constant 64 : index
    %61 = vector.load %arg11[%c7_79, %c64_80] : memref<32x128xf32, #tpu.memory_space<vmem>>, vector<1x64xf32>
    %c1_81 = arith.constant 1 : index
    %c256_82 = arith.constant 256 : index
    %62 = vector.load %arg13[%c1_81, %c256_82] : memref<2x1024xf32, #tpu.memory_space<vmem>>, vector<1x64xf32>
    tpu.vector_store %arg13[%c1_81, %c256_82], %61 {strides = array<i32>} : memref<2x1024xf32, #tpu.memory_space<vmem>>, vector<1x64xf32>,
    %c8_83 = arith.constant 8 : index
    %c64_84 = arith.constant 64 : index
    %63 = vector.load %arg11[%c8_83, %c64_84] : memref<32x128xf32, #tpu.memory_space<vmem>>, vector<1x64xf32>
    %c1_85 = arith.constant 1 : index
    %c320_86 = arith.constant 320 : index
    %64 = vector.load %arg13[%c1_85, %c320_86] : memref<2x1024xf32, #tpu.memory_space<vmem>>, vector<1x64xf32>
    tpu.vector_store %arg13[%c1_85, %c320_86], %63 {strides = array<i32>} : memref<2x1024xf32, #tpu.memory_space<vmem>>, vector<1x64xf32>,
    %c9_87 = arith.constant 9 : index
    %c64_88 = arith.constant 64 : index
    %65 = vector.load %arg11[%c9_87, %c64_88] : memref<32x128xf32, #tpu.memory_space<vmem>>, vector<1x64xf32>
    %c1_89 = arith.constant 1 : index
    %c384_90 = arith.constant 384 : index
    %66 = vector.load %arg13[%c1_89, %c384_90] : memref<2x1024xf32, #tpu.memory_space<vmem>>, vector<1x64xf32>
    tpu.vector_store %arg13[%c1_89, %c384_90], %65 {strides = array<i32>} : memref<2x1024xf32, #tpu.memory_space<vmem>>, vector<1x64xf32>,
    %c10_91 = arith.constant 10 : index
    %c64_92 = arith.constant 64 : index
    %67 = vector.load %arg11[%c10_91, %c64_92] : memref<32x128xf32, #tpu.memory_space<vmem>>, vector<1x64xf32>
    %c1_93 = arith.constant 1 : index
    %c448_94 = arith.constant 448 : index
    %68 = vector.load %arg13[%c1_93, %c448_94] : memref<2x1024xf32, #tpu.memory_space<vmem>>, vector<1x64xf32>
    tpu.vector_store %arg13[%c1_93, %c448_94], %67 {strides = array<i32>} : memref<2x1024xf32, #tpu.memory_space<vmem>>, vector<1x64xf32>,
    %c11_95 = arith.constant 11 : index
    %c64_96 = arith.constant 64 : index
    %69 = vector.load %arg11[%c11_95, %c64_96] : memref<32x128xf32, #tpu.memory_space<vmem>>, vector<1x64xf32>
    %c1_97 = arith.constant 1 : index
    %c512_98 = arith.constant 512 : index
    %70 = vector.load %arg13[%c1_97, %c512_98] : memref<2x1024xf32, #tpu.memory_space<vmem>>, vector<1x64xf32>
    tpu.vector_store %arg13[%c1_97, %c512_98], %69 {strides = array<i32>} : memref<2x1024xf32, #tpu.memory_space<vmem>>, vector<1x64xf32>,
    %c12_99 = arith.constant 12 : index
    %c64_100 = arith.constant 64 : index
    %71 = vector.load %arg11[%c12_99, %c64_100] : memref<32x128xf32, #tpu.memory_space<vmem>>, vector<1x64xf32>
    %c1_101 = arith.constant 1 : index
    %c576_102 = arith.constant 576 : index
    %72 = vector.load %arg13[%c1_101, %c576_102] : memref<2x1024xf32, #tpu.memory_space<vmem>>, vector<1x64xf32>
    tpu.vector_store %arg13[%c1_101, %c576_102], %71 {strides = array<i32>} : memref<2x1024xf32, #tpu.memory_space<vmem>>, vector<1x64xf32>,
    %c13_103 = arith.constant 13 : index
    %c64_104 = arith.constant 64 : index
    %73 = vector.load %arg11[%c13_103, %c64_104] : memref<32x128xf32, #tpu.memory_space<vmem>>, vector<1x64xf32>
    %c1_105 = arith.constant 1 : index
    %c640_106 = arith.constant 640 : index
    %74 = vector.load %arg13[%c1_105, %c640_106] : memref<2x1024xf32, #tpu.memory_space<vmem>>, vector<1x64xf32>
    tpu.vector_store %arg13[%c1_105, %c640_106], %73 {strides = array<i32>} : memref<2x1024xf32, #tpu.memory_space<vmem>>, vector<1x64xf32>,
    %c14_107 = arith.constant 14 : index
    %c64_108 = arith.constant 64 : index
    %75 = vector.load %arg11[%c14_107, %c64_108] : memref<32x128xf32, #tpu.memory_space<vmem>>, vector<1x64xf32>
    %c1_109 = arith.constant 1 : index
    %c704_110 = arith.constant 704 : index
    %76 = vector.load %arg13[%c1_109, %c704_110] : memref<2x1024xf32, #tpu.memory_space<vmem>>, vector<1x64xf32>
    tpu.vector_store %arg13[%c1_109, %c704_110], %75 {strides = array<i32>} : memref<2x1024xf32, #tpu.memory_space<vmem>>, vector<1x64xf32>,
    %c15_111 = arith.constant 15 : index
    %c64_112 = arith.constant 64 : index
    %77 = vector.load %arg11[%c15_111, %c64_112] : memref<32x128xf32, #tpu.memory_space<vmem>>, vector<1x64xf32>
    %c1_113 = arith.constant 1 : index
    %c768_114 = arith.constant 768 : index
    %78 = vector.load %arg13[%c1_113, %c768_114] : memref<2x1024xf32, #tpu.memory_space<vmem>>, vector<1x64xf32>
    tpu.vector_store %arg13[%c1_113, %c768_114], %77 {strides = array<i32>} : memref<2x1024xf32, #tpu.memory_space<vmem>>, vector<1x64xf32>,
    %c16_115 = arith.constant 16 : index
    %c64_116 = arith.constant 64 : index
    %79 = vector.load %arg11[%c16_115, %c64_116] : memref<32x128xf32, #tpu.memory_space<vmem>>, vector<1x64xf32>
    %c1_117 = arith.constant 1 : index
    %c832_118 = arith.constant 832 : index
    %80 = vector.load %arg13[%c1_117, %c832_118] : memref<2x1024xf32, #tpu.memory_space<vmem>>, vector<1x64xf32>
    tpu.vector_store %arg13[%c1_117, %c832_118], %79 {strides = array<i32>} : memref<2x1024xf32, #tpu.memory_space<vmem>>, vector<1x64xf32>,
    %c17_119 = arith.constant 17 : index
    %c64_120 = arith.constant 64 : index
    %81 = vector.load %arg11[%c17_119, %c64_120] : memref<32x128xf32, #tpu.memory_space<vmem>>, vector<1x64xf32>
    %c1_121 = arith.constant 1 : index
    %c896_122 = arith.constant 896 : index
    %82 = vector.load %arg13[%c1_121, %c896_122] : memref<2x1024xf32, #tpu.memory_space<vmem>>, vector<1x64xf32>
    tpu.vector_store %arg13[%c1_121, %c896_122], %81 {strides = array<i32>} : memref<2x1024xf32, #tpu.memory_space<vmem>>, vector<1x64xf32>,
    %c18_123 = arith.constant 18 : index
    %c64_124 = arith.constant 64 : index
    %83 = vector.load %arg11[%c18_123, %c64_124] : memref<32x128xf32, #tpu.memory_space<vmem>>, vector<1x64xf32>
    %c1_125 = arith.constant 1 : index
    %c960_126 = arith.constant 960 : index
    %84 = vector.load %arg13[%c1_125, %c960_126] : memref<2x1024xf32, #tpu.memory_space<vmem>>, vector<1x64xf32>
    tpu.vector_store %arg13[%c1_125, %c960_126], %83 {strides = array<i32>} : memref<2x1024xf32, #tpu.memory_space<vmem>>, vector<1x64xf32>,
    %c0_127 = arith.constant 0 : index
    %c0_128 = arith.constant 0 : index
    %85 = vector.load %arg12[%c0_127, %c0_128] : memref<2x192xf32, #tpu.memory_space<vmem>>, vector<2x192xf32>
    %c0_129 = arith.constant 0 : index
    %c0_130 = arith.constant 0 : index
    %86 = vector.load %arg3[%c0_129, %c0_130] : memref<192x16xf32, #tpu.memory_space<vmem>>, vector<192x16xf32>
    %cst_131 = arith.constant dense<0.000000e+00> : vector<2x16xf32>
    %87 = tpu.matmul %85, %86, %cst_131 {dimension_numbers = #tpu.dot_dimension_numbers<[1], [0], [0], [1], [0, 0, 1, 1], [], []>} : vector<2x192xf32>, vector<192x16xf32>, vector<2x16xf32> -> vector<2x16xf32>
    %c0_132 = arith.constant 0 : index
    %c0_133 = arith.constant 0 : index
    %88 = vector.load %arg4[%c0_132, %c0_133] : memref<1x16xf32, #tpu.memory_space<vmem>>, vector<1x16xf32>
    %89 = vector.broadcast %88 : vector<1x16xf32> to vector<2x16xf32>
    %90 = arith.addf %87, %89 : vector<2x16xf32>
    %cst_134 = arith.constant 0.000000e+00 : f32
    %91 = vector.broadcast %cst_134 : f32 to vector<2x16xf32>
    %92 = arith.maximumf %90, %91 : vector<2x16xf32>
    %c0_135 = arith.constant 0 : index
    %c0_136 = arith.constant 0 : index
    %93 = vector.load %arg5[%c0_135, %c0_136] : memref<16x1xf32, #tpu.memory_space<vmem>>, vector<16x1xf32>
    %cst_137 = arith.constant dense<0.000000e+00> : vector<2x1xf32>
    %94 = tpu.matmul %92, %93, %cst_137 {dimension_numbers = #tpu.dot_dimension_numbers<[1], [0], [0], [1], [0, 0, 1, 1], [], []>} : vector<2x16xf32>, vector<16x1xf32>, vector<2x1xf32> -> vector<2x1xf32>
    %c0_138 = arith.constant 0 : index
    %c0_139 = arith.constant 0 : index
    %95 = vector.load %arg6[%c0_138, %c0_139] : memref<1x1xf32, #tpu.memory_space<vmem>>, vector<1x1xf32>
    %96 = vector.broadcast %95 : vector<1x1xf32> to vector<2x1xf32>
    %97 = arith.addf %94, %96 : vector<2x1xf32>
    %98 = math.tanh %97 : vector<2x1xf32>
    %c0_140 = arith.constant 0 : index
    %c0_141 = arith.constant 0 : index
    %99 = vector.load %arg10[%c0_140, %c0_141] : memref<2x1xf32, #tpu.memory_space<vmem>>, vector<2x1xf32>
    tpu.vector_store %arg10[%c0_140, %c0_141], %98 {strides = array<i32>} : memref<2x1xf32, #tpu.memory_space<vmem>>, vector<2x1xf32>,
    %c0_142 = arith.constant 0 : index
    %c0_143 = arith.constant 0 : index
    %100 = vector.load %arg13[%c0_142, %c0_143] : memref<2x1024xf32, #tpu.memory_space<vmem>>, vector<2x1024xf32>
    %c0_144 = arith.constant 0 : index
    %c0_145 = arith.constant 0 : index
    %101 = vector.load %arg7[%c0_144, %c0_145] : memref<1024x64xf32, #tpu.memory_space<vmem>>, vector<1024x64xf32>
    %cst_146 = arith.constant dense<0.000000e+00> : vector<2x64xf32>
    %102 = tpu.matmul %100, %101, %cst_146 {dimension_numbers = #tpu.dot_dimension_numbers<[1], [0], [0], [1], [0, 0, 1, 1], [], []>} : vector<2x1024xf32>, vector<1024x64xf32>, vector<2x64xf32> -> vector<2x64xf32>
    %c0_147 = arith.constant 0 : index
    %c0_148 = arith.constant 0 : index
    %103 = vector.load %arg8[%c0_147, %c0_148] : memref<1x64xf32, #tpu.memory_space<vmem>>, vector<1x64xf32>
    %104 = vector.broadcast %103 : vector<1x64xf32> to vector<2x64xf32>
    %105 = arith.addf %102, %104 : vector<2x64xf32>
    %cst_149 = arith.constant dense<0xFF800000> : vector<2xf32>
    %106 = vector.multi_reduction <maximumf>, %105, %cst_149 [1] : vector<2x64xf32> to vector<2xf32>
    %107 = vector.shape_cast %106 : vector<2xf32> to vector<2x1xf32>
    %108 = vector.broadcast %107 : vector<2x1xf32> to vector<2x64xf32>
    %109 = arith.subf %105, %108 : vector<2x64xf32>
    %110 = math.exp %109 : vector<2x64xf32>
    %cst_150 = arith.constant dense<0.000000e+00> : vector<2xf32>
    %111 = vector.multi_reduction <add>, %110, %cst_150 [1] : vector<2x64xf32> to vector<2xf32>
    %112 = vector.shape_cast %111 : vector<2xf32> to vector<2x1xf32>
    %113 = tpu.reciprocal %112 {approx = true} : vector<2x1xf32> -> vector<2x1xf32>
    %114 = arith.mulf %112, %113 : vector<2x1xf32>
    %cst_151 = arith.constant 2.000000e+00 : f32
    %115 = vector.broadcast %cst_151 : f32 to vector<2x1xf32>
    %116 = arith.subf %115, %114 : vector<2x1xf32>
    %117 = arith.mulf %113, %116 : vector<2x1xf32>
    %118 = vector.broadcast %117 : vector<2x1xf32> to vector<2x64xf32>
    %119 = arith.mulf %110, %118 : vector<2x64xf32>
    %c0_152 = arith.constant 0 : index
    %c0_153 = arith.constant 0 : index
    %120 = vector.load %arg9[%c0_152, %c0_153] : memref<2x64xf32, #tpu.memory_space<vmem>>, vector<2x64xf32>
    tpu.vector_store %arg9[%c0_152, %c0_153], %119 {strides = array<i32>} : memref<2x64xf32, #tpu.memory_space<vmem>>, vector<2x64xf32>,
    return
  }
}

</mosaic_0001>

<llo_original>
// kernel: out_block_forward.1
$region0: #{out_block_forward.1}
  #allocation0 [shape = 'u32[]', space=smem, size = 0x4, offset = 0x4, fixed_abs, tag = 'smem constant byte address 0x4 - core index']
  #allocation1 [shape = 'u32[72,128]{1,0:T(1,128)}', space=vmem, size = 0x9000, scoped, tag = 'internal scratch']
  #allocation2 [shape = 'f32[32,128]{1,0:T(8,128)}', space=vmem, size = 0x4000, scoped, tag = 'scratch operand']
  #allocation3 [shape = 'f32[2,192]{1,0:T(2,128)}', space=vmem, size = 0x800, scoped, tag = 'scratch operand']
  #allocation4 [shape = 'f32[2,1024]{1,0:T(2,128)}', space=vmem, size = 0x2000, scoped, tag = 'scratch operand']
  #allocation5 [shape = 'f32[1,1]{1,0:T(1,128)S(1)}', space=vmem, size = 0x200, scoped, tag = 'scoped memory for out_block_forward.1']
  %s0 = inlined_call_operand.vmem [shape: f32[32,128], index: 0, kind: input, shape index: {}]
  %s1 = inlined_call_operand.vmem [shape: f32[32,32], index: 1, kind: input, shape index: {}]
  %s2 = inlined_call_operand.vmem [shape: f32[32,1], index: 2, kind: input, shape index: {}]
  %s3 = inlined_call_operand.vmem [shape: f32[192,16], index: 3, kind: input, shape index: {}]
  %s4 = inlined_call_operand.vmem [shape: f32[1,16], index: 4, kind: input, shape index: {}]
  %s5 = inlined_call_operand.vmem [shape: f32[16,1], index: 5, kind: input, shape index: {}]
  %s6 = inlined_call_operand.<no memory space> [shape: f32[1,1], index: 6, kind: input, shape index: {}]
  %s7 = inlined_call_operand.vmem [shape: f32[1024,64], index: 7, kind: input, shape index: {}]
  %s8 = inlined_call_operand.vmem [shape: f32[1,64], index: 8, kind: input, shape index: {}]
  %s9 = inlined_call_operand.hbm [shape: f32[2,64], index: 9, kind: output, shape index: {0}]
  %s10 = inlined_call_operand.vmem [shape: f32[2,1], index: 10, kind: output, shape index: {1}]
  %11 = xla_tuple %s9, %s10
  %s12 = sld [smem:[#allocation0]]
  $region54: #{out_block_forward.1} parent=0
    _
  %s14 = ssub.s32 1, %s12
  %s15 = scalar_select 0, %s14, %s12
  %v16 = vstv %s6
  %17 = vst [vmem:[#allocation5] sm:$0x1] %v16
  $region1: #{out_block_forward.1} parent=0
    #allocation6 [shape = 'u8[1024]{0}', space=vmem, size = 0x400, scoped, tag = 'output window, operand 0, single buffered']
    #allocation7 [shape = 's32[1]{0}', space=sflag, size = 0x4, scoped, tag = 'scoped memory for out_block_forward.1']
    %18 = vsyncpa [#allocation7], 0
    // Predicated region
    $region2: #{out_block_forward.1} parent=1 // pred_check
      _
    $region3: #{out_block_forward.1} parent=1 // pred_check_branch
      %20 = sbr.rel (0) target = $region5
    $region4: #{out_block_forward.1} parent=1 // pred_region
      _
    $region5: #{out_block_forward.1} parent=1 // pred_fallthru
      _
    // Predicated region
    $region6: #{out_block_forward.1} parent=1 // pred_check
      _
    $region7: #{out_block_forward.1} parent=1 // pred_check_branch
      %22 = sbr.rel (0) target = $region9
    $region8: #{out_block_forward.1} parent=1 // pred_region
      _
    $region9: #{out_block_forward.1} parent=1 // pred_fallthru
      _
    // Predicated region
    $region10: #{out_block_forward.1} parent=1 // pred_check
      _
    $region11: #{out_block_forward.1} parent=1 // pred_check_branch
      %24 = sbr.rel (0) target = $region13
    $region12: #{out_block_forward.1} parent=1 // pred_region
      _
    $region13: #{out_block_forward.1} parent=1 // pred_fallthru
      _
    // Predicated region
    $region14: #{out_block_forward.1} parent=1 // pred_check
      _
    $region15: #{out_block_forward.1} parent=1 // pred_check_branch
      %26 = sbr.rel (0) target = $region17
    $region16: #{out_block_forward.1} parent=1 // pred_region
      _
    $region17: #{out_block_forward.1} parent=1 // pred_fallthru
      _
    // Predicated region
    $region18: #{out_block_forward.1} parent=1 // pred_check
      _
    $region19: #{out_block_forward.1} parent=1 // pred_check_branch
      %28 = sbr.rel (0) target = $region21
    $region20: #{out_block_forward.1} parent=1 // pred_region
      _
    $region21: #{out_block_forward.1} parent=1 // pred_fallthru
      _
    // Predicated region
    $region22: #{out_block_forward.1} parent=1 // pred_check
      _
    $region23: #{out_block_forward.1} parent=1 // pred_check_branch
      %30 = sbr.rel (0) target = $region25
    $region24: #{out_block_forward.1} parent=1 // pred_region
      _
    $region25: #{out_block_forward.1} parent=1 // pred_fallthru
      _
    // Predicated region
    $region26: #{out_block_forward.1} parent=1 // pred_check
      _
    $region27: #{out_block_forward.1} parent=1 // pred_check_branch
      %32 = sbr.rel (0) target = $region29
    $region28: #{out_block_forward.1} parent=1 // pred_region
      _
    $region29: #{out_block_forward.1} parent=1 // pred_fallthru
      _
    // Predicated region
    $region30: #{out_block_forward.1} parent=1 // pred_check
      _
    $region31: #{out_block_forward.1} parent=1 // pred_check_branch
      %34 = sbr.rel (0) target = $region33
    $region32: #{out_block_forward.1} parent=1 // pred_region
      _
    $region33: #{out_block_forward.1} parent=1 // pred_fallthru
      _
    // Predicated region
    $region34: #{out_block_forward.1} parent=1 // pred_check
      _
    $region35: #{out_block_forward.1} parent=1 // pred_check_branch
      %36 = sbr.rel (0) target = $region37
    $region36: #{out_block_forward.1} parent=1 // pred_region
      _
    $region37: #{out_block_forward.1} parent=1 // pred_fallthru
      _
    %v37 = vld [vmem:[%s1] sm:$0xff]
    %v38 = vld [vmem:[%s1 + $0x8] sm:$0xff]
    %v39 = vld [vmem:[%s1 + $0x10] sm:$0xff]
    %v40 = vld [vmem:[%s1 + $0x18] sm:$0xff]
    %v41 = vld [vmem:[%s0] sm:$0xff]
    %v42 = vld [vmem:[%s0 + $0x8] sm:$0xff]
    %v43 = vld [vmem:[%s0 + $0x10] sm:$0xff]
    %v44 = vld [vmem:[%s0 + $0x18] sm:$0xff]
    %v45 = vld [vmem:[%s2] sm:$0xff]
    %v46 = vld [vmem:[%s2 + $0x8] sm:$0xff]
    %v47 = vld [vmem:[%s2 + $0x10] sm:$0xff]
    %v48 = vld [vmem:[%s2 + $0x18] sm:$0xff]
    %50 = vset.pattern.permute.xlu0 0
    %51 = vperm.xlu0 %50, %v45
    %v52 = vpop.permute.xlu0 %51
    %55 = vset.pattern.permute.xlu0 0
    %56 = vperm.xlu0 %55, %v46
    %v57 = vpop.permute.xlu0 %56
    %60 = vset.pattern.permute.xlu0 0
    %61 = vperm.xlu0 %60, %v47
    %v62 = vpop.permute.xlu0 %61
    %65 = vset.pattern.permute.xlu0 0
    %66 = vperm.xlu0 %65, %v48
    %v67 = vpop.permute.xlu0 %66
    %vm69 = vcmask 261120
    %v71 = vsel %vm69, %v37, 0
    %v74 = vsel %vm69, %v38, 0
    %v77 = vsel %vm69, %v39, 0
    %v80 = vsel %vm69, %v40, 0
    %82 = vmatpush.msra.mxu0 0.0
    %83 = vmatpush.msra.mxu0 0.0
    %84 = vmatpush.msra.mxu0 0.0
    %85 = vmatpush.msra.mxu0 0.0
    %86 = vmatpush.msra.mxu0 0.0
    %87 = vmatpush.msra.mxu0 0.0
    %88 = vmatpush.msra.mxu0 0.0
    %89 = vmatpush.msra.mxu0 0.0
    %90 = vmatpush.msra.mxu0 0.0
    %91 = vmatpush.msra.mxu0 0.0
    %92 = vmatpush.msra.mxu0 0.0
    %93 = vmatpush.msra.mxu0 0.0
    %94 = vmatpush.msra.mxu0 %v44
    %95 = vmatpush.msra.mxu0 %v43
    %96 = vmatpush.msra.mxu0 %v42
    %97 = vmatpush.msra.mxu0 %v41
    %98 = vmatmul.f32.gmra.mxu0 %v71
    %v99 = vpop.f32.mrf.mxu0
    %v100 = vadd.f32 %v52, %v99
    %101 = vmatmul.f32.gmra.mxu0 %v74
    %v102 = vpop.f32.mrf.mxu0
    %v103 = vadd.f32 %v57, %v102
    %104 = vmatmul.f32.gmra.mxu0 %v77
    %v105 = vpop.f32.mrf.mxu0
    %v106 = vadd.f32 %v62, %v105
    %107 = vmatmul.f32.gmra.mxu0 %v80
    %v108 = vpop.f32.mrf.mxu0
    %v109 = vadd.f32 %v67, %v108
    %110 = vdwg.mxu0
    %v111 = vmax.f32 %v100, 0.0
    %v112 = vmax.f32 %v103, 0.0
    %v113 = vmax.f32 %v106, 0.0
    %v114 = vmax.f32 %v109, 0.0
    %115 = vst [vmem:[#allocation2] sm:$0xff] %v111
    %116 = vst [vmem:[#allocation2 + $0x8] sm:$0xff] %v112
    %117 = vst [vmem:[#allocation2 + $0x10] sm:$0xff] %v113
    %118 = vst [vmem:[#allocation2 + $0x18] sm:$0xff] %v114
    %v119 = vld [vmem:[#allocation2] sm:$0x1]
    %vm120 = vcmask 516096
    %121 = vst.msk [vmem:[#allocation3] sm:$0x1] %vm120, %v119
    %v122 = vld [vmem:[#allocation2 + $0x1] sm:$0x1]
    %124 = vrot.lane.b32.xlu0 %v122, 64
    %v125 = vpop.permute.xlu0 %124
    %vm127 = vcmask 1040896
    %128 = vst.msk [vmem:[#allocation3] sm:$0x1] %vm127, %v125
    %v129 = vld [vmem:[#allocation2 + $0x2] sm:$0x1]
    %130 = vst.msk [vmem:[#allocation3 + $0x2] sm:$0x1] %vm120, %v129
    %v131 = vld [vmem:[#allocation2 + $0x3] sm:$0x1]
    %132 = vst.msk [vmem:[#allocation4] sm:$0x1] %vm120, %v131
    %v133 = vld [vmem:[#allocation2 + $0x4] sm:$0x1]
    %135 = vrot.lane.b32.xlu0 %v133, 64
    %v136 = vpop.permute.xlu0 %135
    %138 = vst.msk [vmem:[#allocation4] sm:$0x1] %vm127, %v136
    %v139 = vld [vmem:[#allocation2 + $0x5] sm:$0x1]
    %140 = vst.msk [vmem:[#allocation4 + $0x2] sm:$0x1] %vm120, %v139
    %v141 = vld [vmem:[#allocation2 + $0x6] sm:$0x1]
    %143 = vrot.lane.b32.xlu0 %v141, 64
    %v144 = vpop.permute.xlu0 %143
    %146 = vst.msk [vmem:[#allocation4 + $0x2] sm:$0x1] %vm127, %v144
    %v147 = vld [vmem:[#allocation2 + $0x7] sm:$0x1]
    %148 = vst.msk [vmem:[#allocation4 + $0x4] sm:$0x1] %vm120, %v147
    %v149 = vld [vmem:[#allocation2 + $0x8] sm:$0x1]
    %151 = vrot.lane.b32.xlu0 %v149, 64
    %v152 = vpop.permute.xlu0 %151
    %154 = vst.msk [vmem:[#allocation4 + $0x4] sm:$0x1] %vm127, %v152
    %v155 = vld [vmem:[#allocation2 + $0x9] sm:$0x1]
    %156 = vst.msk [vmem:[#allocation4 + $0x6] sm:$0x1] %vm120, %v155
    %v157 = vld [vmem:[#allocation2 + $0xa] sm:$0x1]
    %159 = vrot.lane.b32.xlu0 %v157, 64
    %v160 = vpop.permute.xlu0 %159
    %162 = vst.msk [vmem:[#allocation4 + $0x6] sm:$0x1] %vm127, %v160
    %v163 = vld [vmem:[#allocation2 + $0xb] sm:$0x1]
    %164 = vst.msk [vmem:[#allocation4 + $0x8] sm:$0x1] %vm120, %v163
    %v165 = vld [vmem:[#allocation2 + $0xc] sm:$0x1]
    %167 = vrot.lane.b32.xlu0 %v165, 64
    %v168 = vpop.permute.xlu0 %167
    %170 = vst.msk [vmem:[#allocation4 + $0x8] sm:$0x1] %vm127, %v168
    %v171 = vld [vmem:[#allocation2 + $0xd] sm:$0x1]
    %172 = vst.msk [vmem:[#allocation4 + $0xa] sm:$0x1] %vm120, %v171
    %v173 = vld [vmem:[#allocation2 + $0xe] sm:$0x1]
    %175 = vrot.lane.b32.xlu0 %v173, 64
    %v176 = vpop.permute.xlu0 %175
    %178 = vst.msk [vmem:[#allocation4 + $0xa] sm:$0x1] %vm127, %v176
    %v179 = vld [vmem:[#allocation2 + $0xf] sm:$0x1]
    %180 = vst.msk [vmem:[#allocation4 + $0xc] sm:$0x1] %vm120, %v179
    %v181 = vld [vmem:[#allocation2 + $0x10] sm:$0x1]
    %183 = vrot.lane.b32.xlu0 %v181, 64
    %v184 = vpop.permute.xlu0 %183
    %186 = vst.msk [vmem:[#allocation4 + $0xc] sm:$0x1] %vm127, %v184
    %v187 = vld [vmem:[#allocation2 + $0x11] sm:$0x1]
    %188 = vst.msk [vmem:[#allocation4 + $0xe] sm:$0x1] %vm120, %v187
    %v189 = vld [vmem:[#allocation2 + $0x12] sm:$0x1]
    %191 = vrot.lane.b32.xlu0 %v189, 64
    %v192 = vpop.permute.xlu0 %191
    %194 = vst.msk [vmem:[#allocation4 + $0xe] sm:$0x1] %vm127, %v192
    %v195 = vld [vmem:[#allocation2] sm:$0x1]
    %197 = vrot.lane.b32.xlu0 %v195, 64
    %v198 = vpop.permute.xlu0 %197
    %200 = vst.msk [vmem:[#allocation3 + $0x1] sm:$0x1] %vm120, %v198
    %v201 = vld [vmem:[#allocation2 + $0x1] sm:$0x1]
    %202 = vst.msk [vmem:[#allocation3 + $0x1] sm:$0x1] %vm127, %v201
    %v203 = vld [vmem:[#allocation2 + $0x2] sm:$0x1]
    %205 = vrot.lane.b32.xlu0 %v203, 64
    %v206 = vpop.permute.xlu0 %205
    %208 = vst.msk [vmem:[#allocation3 + $0x3] sm:$0x1] %vm120, %v206
    %v209 = vld [vmem:[#allocation2 + $0x3] sm:$0x1]
    %211 = vrot.lane.b32.xlu0 %v209, 64
    %v212 = vpop.permute.xlu0 %211
    %214 = vst.msk [vmem:[#allocation4 + $0x1] sm:$0x1] %vm120, %v212
    %v215 = vld [vmem:[#allocation2 + $0x4] sm:$0x1]
    %216 = vst.msk [vmem:[#allocation4 + $0x1] sm:$0x1] %vm127, %v215
    %v217 = vld [vmem:[#allocation2 + $0x5] sm:$0x1]
    %219 = vrot.lane.b32.xlu0 %v217, 64
    %v220 = vpop.permute.xlu0 %219
    %222 = vst.msk [vmem:[#allocation4 + $0x3] sm:$0x1] %vm120, %v220
    %v223 = vld [vmem:[#allocation2 + $0x6] sm:$0x1]
    %224 = vst.msk [vmem:[#allocation4 + $0x3] sm:$0x1] %vm127, %v223
    %v225 = vld [vmem:[#allocation2 + $0x7] sm:$0x1]
    %227 = vrot.lane.b32.xlu0 %v225, 64
    %v228 = vpop.permute.xlu0 %227
    %230 = vst.msk [vmem:[#allocation4 + $0x5] sm:$0x1] %vm120, %v228
    %v231 = vld [vmem:[#allocation2 + $0x8] sm:$0x1]
    %232 = vst.msk [vmem:[#allocation4 + $0x5] sm:$0x1] %vm127, %v231
    %v233 = vld [vmem:[#allocation2 + $0x9] sm:$0x1]
    %235 = vrot.lane.b32.xlu0 %v233, 64
    %v236 = vpop.permute.xlu0 %235
    %238 = vst.msk [vmem:[#allocation4 + $0x7] sm:$0x1] %vm120, %v236
    %v239 = vld [vmem:[#allocation2 + $0xa] sm:$0x1]
    %240 = vst.msk [vmem:[#allocation4 + $0x7] sm:$0x1] %vm127, %v239
    %v241 = vld [vmem:[#allocation2 + $0xb] sm:$0x1]
    %243 = vrot.lane.b32.xlu0 %v241, 64
    %v244 = vpop.permute.xlu0 %243
    %246 = vst.msk [vmem:[#allocation4 + $0x9] sm:$0x1] %vm120, %v244
    %v247 = vld [vmem:[#allocation2 + $0xc] sm:$0x1]
    %248 = vst.msk [vmem:[#allocation4 + $0x9] sm:$0x1] %vm127, %v247
    %v249 = vld [vmem:[#allocation2 + $0xd] sm:$0x1]
    %251 = vrot.lane.b32.xlu0 %v249, 64
    %v252 = vpop.permute.xlu0 %251
    %254 = vst.msk [vmem:[#allocation4 + $0xb] sm:$0x1] %vm120, %v252
    %v255 = vld [vmem:[#allocation2 + $0xe] sm:$0x1]
    %256 = vst.msk [vmem:[#allocation4 + $0xb] sm:$0x1] %vm127, %v255
    %v257 = vld [vmem:[#allocation2 + $0xf] sm:$0x1]
    %259 = vrot.lane.b32.xlu0 %v257, 64
    %v260 = vpop.permute.xlu0 %259
    %262 = vst.msk [vmem:[#allocation4 + $0xd] sm:$0x1] %vm120, %v260
    %v263 = vld [vmem:[#allocation2 + $0x10] sm:$0x1]
    %264 = vst.msk [vmem:[#allocation4 + $0xd] sm:$0x1] %vm127, %v263
    %v265 = vld [vmem:[#allocation2 + $0x11] sm:$0x1]
    %267 = vrot.lane.b32.xlu0 %v265, 64
    %v268 = vpop.permute.xlu0 %267
    %270 = vst.msk [vmem:[#allocation4 + $0xf] sm:$0x1] %vm120, %v268
    %v271 = vld [vmem:[#allocation2 + $0x12] sm:$0x1]
    %272 = vst.msk [vmem:[#allocation4 + $0xf] sm:$0x1] %vm127, %v271
    %v273 = vld [vmem:[#allocation3] sm:$0xf]
    %v274 = vld [vmem:[%s3] sm:$0xff]
    %v275 = vld [vmem:[%s3 + $0x8] sm:$0xff]
    %v276 = vld [vmem:[%s3 + $0x10] sm:$0xff]
    %v277 = vld [vmem:[%s3 + $0x18] sm:$0xff]
    %v278 = vld [vmem:[%s3 + $0x20] sm:$0xff]
    %v279 = vld [vmem:[%s3 + $0x28] sm:$0xff]
    %v280 = vld [vmem:[%s3 + $0x30] sm:$0xff]
    %v281 = vld [vmem:[%s3 + $0x38] sm:$0xff]
    %v282 = vld [vmem:[%s3 + $0x40] sm:$0xff]
    %v283 = vld [vmem:[%s3 + $0x48] sm:$0xff]
    %v284 = vld [vmem:[%s3 + $0x50] sm:$0xff]
    %v285 = vld [vmem:[%s3 + $0x58] sm:$0xff]
    %v286 = vld [vmem:[%s3 + $0x60] sm:$0xff]
    %v287 = vld [vmem:[%s3 + $0x68] sm:$0xff]
    %v288 = vld [vmem:[%s3 + $0x70] sm:$0xff]
    %v289 = vld [vmem:[%s3 + $0x78] sm:$0xff]
    %v290 = vld [vmem:[%s3 + $0x80] sm:$0xff]
    %v291 = vld [vmem:[%s3 + $0x88] sm:$0xff]
    %v292 = vld [vmem:[%s3 + $0x90] sm:$0xff]
    %v293 = vld [vmem:[%s3 + $0x98] sm:$0xff]
    %v294 = vld [vmem:[%s3 + $0xa0] sm:$0xff]
    %v295 = vld [vmem:[%s3 + $0xa8] sm:$0xff]
    %v296 = vld [vmem:[%s3 + $0xb0] sm:$0xff]
    %v297 = vld [vmem:[%s3 + $0xb8] sm:$0xff]
    %v298 = vld [vmem:[%s4] sm:$0x1]
    %v300 = vperm.slane %v298, 0
    %303 = vst [vmem:[#allocation1] ss:$4 sm:$0xff] %v273
    %v304 = vld.sshfl [vmem:[#allocation1] sm:$0xff pattern:$0x73625140]
    %v305 = vld.sshfl [vmem:[#allocation1 + $0x8] sm:$0xff pattern:$0x73625140]
    %vm307 = vcmask 523264
    %v308 = vsel %vm307, %v305, 0
    %310 = vmatpush.msra.mxu0 %v289
    %311 = vmatpush.msra.mxu0 %v288
    %312 = vmatpush.msra.mxu0 %v287
    %313 = vmatpush.msra.mxu0 %v286
    %314 = vmatpush.msra.mxu0 %v285
    %315 = vmatpush.msra.mxu0 %v284
    %316 = vmatpush.msra.mxu0 %v283
    %317 = vmatpush.msra.mxu0 %v282
    %318 = vmatpush.msra.mxu0 %v281
    %319 = vmatpush.msra.mxu0 %v280
    %320 = vmatpush.msra.mxu0 %v279
    %321 = vmatpush.msra.mxu0 %v278
    %322 = vmatpush.msra.mxu0 %v277
    %323 = vmatpush.msra.mxu0 %v276
    %324 = vmatpush.msra.mxu0 %v275
    %325 = vmatpush.msra.mxu0 %v274
    %326 = vmatmul.f32.gmra.mxu0 %v304
    %v327 = vpop.f32.mrf.mxu0
    %v328 = vadd.f32 %v300, %v327
    %329 = vdwg.mxu0
    %330 = vmatpush.msra.mxu0 0.0
    %331 = vmatpush.msra.mxu0 0.0
    %332 = vmatpush.msra.mxu0 0.0
    %333 = vmatpush.msra.mxu0 0.0
    %334 = vmatpush.msra.mxu0 0.0
    %335 = vmatpush.msra.mxu0 0.0
    %336 = vmatpush.msra.mxu0 0.0
    %337 = vmatpush.msra.mxu0 0.0
    %338 = vmatpush.msra.mxu0 %v297
    %339 = vmatpush.msra.mxu0 %v296
    %340 = vmatpush.msra.mxu0 %v295
    %341 = vmatpush.msra.mxu0 %v294
    %342 = vmatpush.msra.mxu0 %v293
    %343 = vmatpush.msra.mxu0 %v292
    %344 = vmatpush.msra.mxu0 %v291
    %345 = vmatpush.msra.mxu0 %v290
    %346 = vmatmul.f32.gmra.mxu0 %v308
    %v347 = vpop.f32.mrf.mxu0
    %v348 = vadd.f32 %v328, %v347
    %349 = vdwg.mxu0
    %v350 = vmax.f32 %v348, 0.0
    %v351 = vld [vmem:[%s5] sm:$0xff]
    %v352 = vld [vmem:[%s5 + $0x8] sm:$0xff]
    %v353 = vld [vmem:[#allocation5] sm:$0x1]
    %v355 = vperm.slane %v353, 0
    %vm357 = vcmask 130048
    %v359 = vsel %vm357, %v350, 0
    %361 = vmatpush.msra.mxu0 0.0
    %362 = vmatpush.msra.mxu0 0.0
    %363 = vmatpush.msra.mxu0 0.0
    %364 = vmatpush.msra.mxu0 0.0
    %365 = vmatpush.msra.mxu0 0.0
    %366 = vmatpush.msra.mxu0 0.0
    %367 = vmatpush.msra.mxu0 0.0
    %368 = vmatpush.msra.mxu0 0.0
    %369 = vmatpush.msra.mxu0 0.0
    %370 = vmatpush.msra.mxu0 0.0
    %371 = vmatpush.msra.mxu0 0.0
    %372 = vmatpush.msra.mxu0 0.0
    %373 = vmatpush.msra.mxu0 0.0
    %374 = vmatpush.msra.mxu0 0.0
    %375 = vmatpush.msra.mxu0 %v352
    %376 = vmatpush.msra.mxu0 %v351
    %377 = vmatmul.f32.gmra.mxu0 %v359
    %v378 = vpop.f32.mrf.mxu0
    %v379 = vadd.f32 %v355, %v378
    %380 = vdwg.mxu0
    %v381 = vtanh.pop %v379
    %vm382 = vcmask 1024
    %383 = vst.msk [vmem:[%s10] sm:$0x3] %vm382, %v381
    %v384 = vld [vmem:[#allocation4] sm:$0xff]
    %v385 = vld [vmem:[#allocation4 + $0x8] sm:$0xff]
    %v386 = vld [vmem:[%s7] sm:$0xff]
    %v387 = vld [vmem:[%s7 + $0x8] sm:$0xff]
    %v388 = vld [vmem:[%s7 + $0x10] sm:$0xff]
    %v389 = vld [vmem:[%s7 + $0x18] sm:$0xff]
    %v390 = vld [vmem:[%s7 + $0x20] sm:$0xff]
    %v391 = vld [vmem:[%s7 + $0x28] sm:$0xff]
    %v392 = vld [vmem:[%s7 + $0x30] sm:$0xff]
    %v393 = vld [vmem:[%s7 + $0x38] sm:$0xff]
    %v394 = vld [vmem:[%s7 + $0x40] sm:$0xff]
    %v395 = vld [vmem:[%s7 + $0x48] sm:$0xff]
    %v396 = vld [vmem:[%s7 + $0x50] sm:$0xff]
    %v397 = vld [vmem:[%s7 + $0x58] sm:$0xff]
    %v398 = vld [vmem:[%s7 + $0x60] sm:$0xff]
    %v399 = vld [vmem:[%s7 + $0x68] sm:$0xff]
    %v400 = vld [vmem:[%s7 + $0x70] sm:$0xff]
    %v401 = vld [vmem:[%s7 + $0x78] sm:$0xff]
    %v402 = vld [vmem:[%s7 + $0x80] sm:$0xff]
    %v403 = vld [vmem:[%s7 + $0x88] sm:$0xff]
    %v404 = vld [vmem:[%s7 + $0x90] sm:$0xff]
    %v405 = vld [vmem:[%s7 + $0x98] sm:$0xff]
    %v406 = vld [vmem:[%s7 + $0xa0] sm:$0xff]
    %v407 = vld [vmem:[%s7 + $0xa8] sm:$0xff]
    %v408 = vld [vmem:[%s7 + $0xb0] sm:$0xff]
    %v409 = vld [vmem:[%s7 + $0xb8] sm:$0xff]
    %v410 = vld [vmem:[%s7 + $0xc0] sm:$0xff]
    %v411 = vld [vmem:[%s7 + $0xc8] sm:$0xff]
    %v412 = vld [vmem:[%s7 + $0xd0] sm:$0xff]
    %v413 = vld [vmem:[%s7 + $0xd8] sm:$0xff]
    %v414 = vld [vmem:[%s7 + $0xe0] sm:$0xff]
    %v415 = vld [vmem:[%s7 + $0xe8] sm:$0xff]
    %v416 = vld [vmem:[%s7 + $0xf0] sm:$0xff]
    %v417 = vld [vmem:[%s7 + $0xf8] sm:$0xff]
    %v418 = vld [vmem:[%s7 + $0x100] sm:$0xff]
    %v419 = vld [vmem:[%s7 + $0x108] sm:$0xff]
    %v420 = vld [vmem:[%s7 + $0x110] sm:$0xff]
    %v421 = vld [vmem:[%s7 + $0x118] sm:$0xff]
    %v422 = vld [vmem:[%s7 + $0x120] sm:$0xff]
    %v423 = vld [vmem:[%s7 + $0x128] sm:$0xff]
    %v424 = vld [vmem:[%s7 + $0x130] sm:$0xff]
    %v425 = vld [vmem:[%s7 + $0x138] sm:$0xff]
    %v426 = vld [vmem:[%s7 + $0x140] sm:$0xff]
    %v427 = vld [vmem:[%s7 + $0x148] sm:$0xff]
    %v428 = vld [vmem:[%s7 + $0x150] sm:$0xff]
    %v429 = vld [vmem:[%s7 + $0x158] sm:$0xff]
    %v430 = vld [vmem:[%s7 + $0x160] sm:$0xff]
    %v431 = vld [vmem:[%s7 + $0x168] sm:$0xff]
    %v432 = vld [vmem:[%s7 + $0x170] sm:$0xff]
    %v433 = vld [vmem:[%s7 + $0x178] sm:$0xff]
    %v434 = vld [vmem:[%s7 + $0x180] sm:$0xff]
    %v435 = vld [vmem:[%s7 + $0x188] sm:$0xff]
    %v436 = vld [vmem:[%s7 + $0x190] sm:$0xff]
    %v437 = vld [vmem:[%s7 + $0x198] sm:$0xff]
    %v438 = vld [vmem:[%s7 + $0x1a0] sm:$0xff]
    %v439 = vld [vmem:[%s7 + $0x1a8] sm:$0xff]
    %v440 = vld [vmem:[%s7 + $0x1b0] sm:$0xff]
    %v441 = vld [vmem:[%s7 + $0x1b8] sm:$0xff]
    %v442 = vld [vmem:[%s7 + $0x1c0] sm:$0xff]
    %v443 = vld [vmem:[%s7 + $0x1c8] sm:$0xff]
    %v444 = vld [vmem:[%s7 + $0x1d0] sm:$0xff]
    %v445 = vld [vmem:[%s7 + $0x1d8] sm:$0xff]
    %v446 = vld [vmem:[%s7 + $0x1e0] sm:$0xff]
    %v447 = vld [vmem:[%s7 + $0x1e8] sm:$0xff]
    %v448 = vld [vmem:[%s7 + $0x1f0] sm:$0xff]
    %v449 = vld [vmem:[%s7 + $0x1f8] sm:$0xff]
    %v450 = vld [vmem:[%s7 + $0x200] sm:$0xff]
    %v451 = vld [vmem:[%s7 + $0x208] sm:$0xff]
    %v452 = vld [vmem:[%s7 + $0x210] sm:$0xff]
    %v453 = vld [vmem:[%s7 + $0x218] sm:$0xff]
    %v454 = vld [vmem:[%s7 + $0x220] sm:$0xff]
    %v455 = vld [vmem:[%s7 + $0x228] sm:$0xff]
    %v456 = vld [vmem:[%s7 + $0x230] sm:$0xff]
    %v457 = vld [vmem:[%s7 + $0x238] sm:$0xff]
    %v458 = vld [vmem:[%s7 + $0x240] sm:$0xff]
    %v459 = vld [vmem:[%s7 + $0x248] sm:$0xff]
    %v460 = vld [vmem:[%s7 + $0x250] sm:$0xff]
    %v461 = vld [vmem:[%s7 + $0x258] sm:$0xff]
    %v462 = vld [vmem:[%s7 + $0x260] sm:$0xff]
    %v463 = vld [vmem:[%s7 + $0x268] sm:$0xff]
    %v464 = vld [vmem:[%s7 + $0x270] sm:$0xff]
    %v465 = vld [vmem:[%s7 + $0x278] sm:$0xff]
    %v466 = vld [vmem:[%s7 + $0x280] sm:$0xff]
    %v467 = vld [vmem:[%s7 + $0x288] sm:$0xff]
    %v468 = vld [vmem:[%s7 + $0x290] sm:$0xff]
    %v469 = vld [vmem:[%s7 + $0x298] sm:$0xff]
    %v470 = vld [vmem:[%s7 + $0x2a0] sm:$0xff]
    %v471 = vld [vmem:[%s7 + $0x2a8] sm:$0xff]
    %v472 = vld [vmem:[%s7 + $0x2b0] sm:$0xff]
    %v473 = vld [vmem:[%s7 + $0x2b8] sm:$0xff]
    %v474 = vld [vmem:[%s7 + $0x2c0] sm:$0xff]
    %v475 = vld [vmem:[%s7 + $0x2c8] sm:$0xff]
    %v476 = vld [vmem:[%s7 + $0x2d0] sm:$0xff]
    %v477 = vld [vmem:[%s7 + $0x2d8] sm:$0xff]
    %v478 = vld [vmem:[%s7 + $0x2e0] sm:$0xff]
    %v479 = vld [vmem:[%s7 + $0x2e8] sm:$0xff]
    %v480 = vld [vmem:[%s7 + $0x2f0] sm:$0xff]
    %v481 = vld [vmem:[%s7 + $0x2f8] sm:$0xff]
    %v482 = vld [vmem:[%s7 + $0x300] sm:$0xff]
    %v483 = vld [vmem:[%s7 + $0x308] sm:$0xff]
    %v484 = vld [vmem:[%s7 + $0x310] sm:$0xff]
    %v485 = vld [vmem:[%s7 + $0x318] sm:$0xff]
    %v486 = vld [vmem:[%s7 + $0x320] sm:$0xff]
    %v487 = vld [vmem:[%s7 + $0x328] sm:$0xff]
    %v488 = vld [vmem:[%s7 + $0x330] sm:$0xff]
    %v489 = vld [vmem:[%s7 + $0x338] sm:$0xff]
    %v490 = vld [vmem:[%s7 + $0x340] sm:$0xff]
    %v491 = vld [vmem:[%s7 + $0x348] sm:$0xff]
    %v492 = vld [vmem:[%s7 + $0x350] sm:$0xff]
    %v493 = vld [vmem:[%s7 + $0x358] sm:$0xff]
    %v494 = vld [vmem:[%s7 + $0x360] sm:$0xff]
    %v495 = vld [vmem:[%s7 + $0x368] sm:$0xff]
    %v496 = vld [vmem:[%s7 + $0x370] sm:$0xff]
    %v497 = vld [vmem:[%s7 + $0x378] sm:$0xff]
    %v498 = vld [vmem:[%s7 + $0x380] sm:$0xff]
    %v499 = vld [vmem:[%s7 + $0x388] sm:$0xff]
    %v500 = vld [vmem:[%s7 + $0x390] sm:$0xff]
    %v501 = vld [vmem:[%s7 + $0x398] sm:$0xff]
    %v502 = vld [vmem:[%s7 + $0x3a0] sm:$0xff]
    %v503 = vld [vmem:[%s7 + $0x3a8] sm:$0xff]
    %v504 = vld [vmem:[%s7 + $0x3b0] sm:$0xff]
    %v505 = vld [vmem:[%s7 + $0x3b8] sm:$0xff]
    %v506 = vld [vmem:[%s7 + $0x3c0] sm:$0xff]
    %v507 = vld [vmem:[%s7 + $0x3c8] sm:$0xff]
    %v508 = vld [vmem:[%s7 + $0x3d0] sm:$0xff]
    %v509 = vld [vmem:[%s7 + $0x3d8] sm:$0xff]
    %v510 = vld [vmem:[%s7 + $0x3e0] sm:$0xff]
    %v511 = vld [vmem:[%s7 + $0x3e8] sm:$0xff]
    %v512 = vld [vmem:[%s7 + $0x3f0] sm:$0xff]
    %v513 = vld [vmem:[%s7 + $0x3f8] sm:$0xff]
    %v514 = vld [vmem:[%s8] sm:$0x1]
    %v516 = vperm.slane %v514, 0
    %520 = vst [vmem:[#allocation1] ss:$4 sm:$0xff] %v384
    %s521 = scalar_lea.vmem [#allocation1], 32
    %522 = vst [vmem:[%s521] ss:$4 sm:$0xff] %v385
    %v523 = vld.sshfl [vmem:[#allocation1] sm:$0xff pattern:$0x73625140]
    %v524 = vld.sshfl [vmem:[#allocation1 + $0x8] sm:$0xff pattern:$0x73625140]
    %v525 = vld.sshfl [vmem:[#allocation1 + $0x10] sm:$0xff pattern:$0x73625140]
    %v526 = vld.sshfl [vmem:[#allocation1 + $0x18] sm:$0xff pattern:$0x73625140]
    %v527 = vld.sshfl [vmem:[#allocation1 + $0x20] sm:$0xff pattern:$0x73625140]
    %v528 = vld.sshfl [vmem:[#allocation1 + $0x28] sm:$0xff pattern:$0x73625140]
    %v529 = vld.sshfl [vmem:[#allocation1 + $0x30] sm:$0xff pattern:$0x73625140]
    %v530 = vld.sshfl [vmem:[#allocation1 + $0x38] sm:$0xff pattern:$0x73625140]
    %539 = vmatpush.msra.mxu0 %v401
    %540 = vmatpush.msra.mxu0 %v400
    %541 = vmatpush.msra.mxu0 %v399
    %542 = vmatpush.msra.mxu0 %v398
    %543 = vmatpush.msra.mxu0 %v397
    %544 = vmatpush.msra.mxu0 %v396
    %545 = vmatpush.msra.mxu0 %v395
    %546 = vmatpush.msra.mxu0 %v394
    %547 = vmatpush.msra.mxu0 %v393
    %548 = vmatpush.msra.mxu0 %v392
    %549 = vmatpush.msra.mxu0 %v391
    %550 = vmatpush.msra.mxu0 %v390
    %551 = vmatpush.msra.mxu0 %v389
    %552 = vmatpush.msra.mxu0 %v388
    %553 = vmatpush.msra.mxu0 %v387
    %554 = vmatpush.msra.mxu0 %v386
    %555 = vmatmul.f32.gmra.mxu0 %v523
    %v556 = vpop.f32.mrf.mxu0
    %v557 = vadd.f32 %v516, %v556
    %558 = vdwg.mxu0
    %559 = vmatpush.msra.mxu0 %v417
    %560 = vmatpush.msra.mxu0 %v416
    %561 = vmatpush.msra.mxu0 %v415
    %562 = vmatpush.msra.mxu0 %v414
    %563 = vmatpush.msra.mxu0 %v413
    %564 = vmatpush.msra.mxu0 %v412
    %565 = vmatpush.msra.mxu0 %v411
    %566 = vmatpush.msra.mxu0 %v410
    %567 = vmatpush.msra.mxu0 %v409
    %568 = vmatpush.msra.mxu0 %v408
    %569 = vmatpush.msra.mxu0 %v407
    %570 = vmatpush.msra.mxu0 %v406
    %571 = vmatpush.msra.mxu0 %v405
    %572 = vmatpush.msra.mxu0 %v404
    %573 = vmatpush.msra.mxu0 %v403
    %574 = vmatpush.msra.mxu0 %v402
    %575 = vmatmul.f32.gmra.mxu0 %v524
    %v576 = vpop.f32.mrf.mxu0
    %v577 = vadd.f32 %v557, %v576
    %578 = vdwg.mxu0
    %579 = vmatpush.msra.mxu0 %v433
    %580 = vmatpush.msra.mxu0 %v432
    %581 = vmatpush.msra.mxu0 %v431
    %582 = vmatpush.msra.mxu0 %v430
    %583 = vmatpush.msra.mxu0 %v429
    %584 = vmatpush.msra.mxu0 %v428
    %585 = vmatpush.msra.mxu0 %v427
    %586 = vmatpush.msra.mxu0 %v426
    %587 = vmatpush.msra.mxu0 %v425
    %588 = vmatpush.msra.mxu0 %v424
    %589 = vmatpush.msra.mxu0 %v423
    %590 = vmatpush.msra.mxu0 %v422
    %591 = vmatpush.msra.mxu0 %v421
    %592 = vmatpush.msra.mxu0 %v420
    %593 = vmatpush.msra.mxu0 %v419
    %594 = vmatpush.msra.mxu0 %v418
    %595 = vmatmul.f32.gmra.mxu0 %v525
    %v596 = vpop.f32.mrf.mxu0
    %v597 = vadd.f32 %v577, %v596
    %598 = vdwg.mxu0
    %599 = vmatpush.msra.mxu0 %v449
    %600 = vmatpush.msra.mxu0 %v448
    %601 = vmatpush.msra.mxu0 %v447
    %602 = vmatpush.msra.mxu0 %v446
    %603 = vmatpush.msra.mxu0 %v445
    %604 = vmatpush.msra.mxu0 %v444
    %605 = vmatpush.msra.mxu0 %v443
    %606 = vmatpush.msra.mxu0 %v442
    %607 = vmatpush.msra.mxu0 %v441
    %608 = vmatpush.msra.mxu0 %v440
    %609 = vmatpush.msra.mxu0 %v439
    %610 = vmatpush.msra.mxu0 %v438
    %611 = vmatpush.msra.mxu0 %v437
    %612 = vmatpush.msra.mxu0 %v436
    %613 = vmatpush.msra.mxu0 %v435
    %614 = vmatpush.msra.mxu0 %v434
    %615 = vmatmul.f32.gmra.mxu0 %v526
    %v616 = vpop.f32.mrf.mxu0
    %v617 = vadd.f32 %v597, %v616
    %618 = vdwg.mxu0
    %619 = vmatpush.msra.mxu0 %v465
    %620 = vmatpush.msra.mxu0 %v464
    %621 = vmatpush.msra.mxu0 %v463
    %622 = vmatpush.msra.mxu0 %v462
    %623 = vmatpush.msra.mxu0 %v461
    %624 = vmatpush.msra.mxu0 %v460
    %625 = vmatpush.msra.mxu0 %v459
    %626 = vmatpush.msra.mxu0 %v458
    %627 = vmatpush.msra.mxu0 %v457
    %628 = vmatpush.msra.mxu0 %v456
    %629 = vmatpush.msra.mxu0 %v455
    %630 = vmatpush.msra.mxu0 %v454
    %631 = vmatpush.msra.mxu0 %v453
    %632 = vmatpush.msra.mxu0 %v452
    %633 = vmatpush.msra.mxu0 %v451
    %634 = vmatpush.msra.mxu0 %v450
    %635 = vmatmul.f32.gmra.mxu0 %v527
    %v636 = vpop.f32.mrf.mxu0
    %v637 = vadd.f32 %v617, %v636
    %638 = vdwg.mxu0
    %639 = vmatpush.msra.mxu0 %v481
    %640 = vmatpush.msra.mxu0 %v480
    %641 = vmatpush.msra.mxu0 %v479
    %642 = vmatpush.msra.mxu0 %v478
    %643 = vmatpush.msra.mxu0 %v477
    %644 = vmatpush.msra.mxu0 %v476
    %645 = vmatpush.msra.mxu0 %v475
    %646 = vmatpush.msra.mxu0 %v474
    %647 = vmatpush.msra.mxu0 %v473
    %648 = vmatpush.msra.mxu0 %v472
    %649 = vmatpush.msra.mxu0 %v471
    %650 = vmatpush.msra.mxu0 %v470
    %651 = vmatpush.msra.mxu0 %v469
    %652 = vmatpush.msra.mxu0 %v468
    %653 = vmatpush.msra.mxu0 %v467
    %654 = vmatpush.msra.mxu0 %v466
    %655 = vmatmul.f32.gmra.mxu0 %v528
    %v656 = vpop.f32.mrf.mxu0
    %v657 = vadd.f32 %v637, %v656
    %658 = vdwg.mxu0
    %659 = vmatpush.msra.mxu0 %v497
    %660 = vmatpush.msra.mxu0 %v496
    %661 = vmatpush.msra.mxu0 %v495
    %662 = vmatpush.msra.mxu0 %v494
    %663 = vmatpush.msra.mxu0 %v493
    %664 = vmatpush.msra.mxu0 %v492
    %665 = vmatpush.msra.mxu0 %v491
    %666 = vmatpush.msra.mxu0 %v490
    %667 = vmatpush.msra.mxu0 %v489
    %668 = vmatpush.msra.mxu0 %v488
    %669 = vmatpush.msra.mxu0 %v487
    %670 = vmatpush.msra.mxu0 %v486
    %671 = vmatpush.msra.mxu0 %v485
    %672 = vmatpush.msra.mxu0 %v484
    %673 = vmatpush.msra.mxu0 %v483
    %674 = vmatpush.msra.mxu0 %v482
    %675 = vmatmul.f32.gmra.mxu0 %v529
    %v676 = vpop.f32.mrf.mxu0
    %v677 = vadd.f32 %v657, %v676
    %678 = vdwg.mxu0
    %679 = vmatpush.msra.mxu0 %v513
    %680 = vmatpush.msra.mxu0 %v512
    %681 = vmatpush.msra.mxu0 %v511
    %682 = vmatpush.msra.mxu0 %v510
    %683 = vmatpush.msra.mxu0 %v509
    %684 = vmatpush.msra.mxu0 %v508
    %685 = vmatpush.msra.mxu0 %v507
    %686 = vmatpush.msra.mxu0 %v506
    %687 = vmatpush.msra.mxu0 %v505
    %688 = vmatpush.msra.mxu0 %v504
    %689 = vmatpush.msra.mxu0 %v503
    %690 = vmatpush.msra.mxu0 %v502
    %691 = vmatpush.msra.mxu0 %v501
    %692 = vmatpush.msra.mxu0 %v500
    %693 = vmatpush.msra.mxu0 %v499
    %694 = vmatpush.msra.mxu0 %v498
    %695 = vmatmul.f32.gmra.mxu0 %v530
    %v696 = vpop.f32.mrf.mxu0
    %v697 = vadd.f32 %v677, %v696
    %698 = vdwg.mxu0
    %vm699 = vcmask 517120
    %v700 = vsel %vm699, %v697, -inf
    %701 = vmax.xlane.f32.xlu0 %v700
    %v702 = vpop.xlane.xlu0 %701
    %v703 = vsub.f32 %v697, %v702
    %v704 = vmul.f32 %v703, 1.442695
    %v705 = vpow.pop %v704
    %v706 = vsel %vm699, %v705, 0.0
    %707 = vadd.xlane.f32.xlu0 %v706
    %v708 = vpop.xlane.xlu0 %707
    %v709 = vrcp.pop %v708
    %v710 = vmul.f32 %v708, %v709
    %v711 = vsub.f32 2.0, %v710
    %v712 = vmul.f32 %v709, %v711
    %v713 = vmul.f32 %v705, %v712
    %714 = vst.msk [vmem:[#allocation6] sm:$0x3] %vm699, %v713
    // Predicated region
    $region38: #{out_block_forward.1} parent=1 // pred_check
      _
    $region39: #{out_block_forward.1} parent=1 // pred_check_branch
      %716 = sbr.rel (0) target = $region41
    $region40: #{out_block_forward.1} parent=1 // pred_region
      %718 = vsyncadd [#allocation7], 0
      %s720 = sshll.u32 [#allocation6], 4
      %s721 = int_to_ptr.vmem [resolvable:$true] %s720
      %s722 = sshll.u32 %s9, 4
      %s723 = int_to_ptr.hbm [resolvable:$true] %s722
      %725 = dma.vmem_to_hbm [thread:$0]  %s721, 32, %s723, [#allocation7]
    $region41: #{out_block_forward.1} parent=1 // pred_fallthru
      _
    // Predicated region
    $region42: #{out_block_forward.1} parent=1 // pred_check
      _
    $region43: #{out_block_forward.1} parent=1 // pred_check_branch
      %727 = sbr.rel (0) target = $region45
    $region44: #{out_block_forward.1} parent=1 // pred_region
      _
    $region45: #{out_block_forward.1} parent=1 // pred_fallthru
      _
    // Predicated region
    $region46: #{out_block_forward.1} parent=1 // pred_check
      _
    $region47: #{out_block_forward.1} parent=1 // pred_check_branch
      %729 = sbr.rel (0) target = $region49
    $region48: #{out_block_forward.1} parent=1 // pred_region
      %731 = dma.done [#allocation7], 32
    $region49: #{out_block_forward.1} parent=1 // pred_fallthru
      _
    // Predicated region
    $region50: #{out_block_forward.1} parent=1 // pred_check
      _
    $region51: #{out_block_forward.1} parent=1 // pred_check_branch
      %733 = sbr.rel (0) target = $region53
    $region52: #{out_block_forward.1} parent=1 // pred_region
      _
    $region53: #{out_block_forward.1} parent=1 // pred_fallthru
      _
    %734 = vsyncpa [#allocation7], 1

</llo_original>
